<compile_context>
chip_gen: v5e
topology: v5e:2x2
jax: 0.10.0
libtpu: 0.0.40
codegen_flags: <defaults>
</compile_context>

<pallas_src>
import math

import jax
import jax.numpy as jnp
from jax.experimental import pallas as pl
from jax.experimental.pallas import tpu as pltpu

_LANES = 128
_SUBLANES = 8
_TARGET_BLOCK_BYTES = 2 * 1024 * 1024   # ~2 MiB input block per grid step
_MAX_BATCH_TILE = 16384                 # hard cap on the batch tile (lanes)


def _round_up(v, m):
    return -(-v // m) * m


def _round_down_lanes(v):
    return max(_LANES, (v // _LANES) * _LANES)


def _pick_tiling(n_pad, b_pad):
    """Adaptive (batch_tile, padded_batch, vmem_limit) for the 1-D batch grid."""
    try:
        vmem_cap = int(pltpu.get_tpu_info().vmem_capacity_bytes)
    except Exception:
        vmem_cap = 64 * 1024 * 1024      # v7x per-TC physical (most restrictive)

    # ~2 MiB input block per step (large DMA payloads when N is small) ...
    tb = _round_down_lanes(_TARGET_BLOCK_BYTES // (n_pad * 4))
    tb = min(tb, _MAX_BATCH_TILE, b_pad)
    # ... capped so (2 double-buffered input copies + ~5 live (N, tb) f32
    # temporaries) stay well inside this generation's VMEM.
    tb_vmem = _round_down_lanes(int(vmem_cap * 0.45) // (7 * n_pad * 4))
    tb = max(_LANES, min(tb, tb_vmem))

    # Guarantee >= 2 grid steps (megacore sharding on v7x, DMA/compute overlap);
    # >= 4 when the per-step block stays >= 1 MiB.
    min_steps = 1
    if b_pad >= 2 * _LANES:
        min_steps = 2
    if b_pad >= 4 * _LANES and n_pad * (b_pad // 4) * 4 >= (1 << 20):
        min_steps = 4
    if min_steps > 1:
        tb = min(tb, _round_down_lanes(b_pad // min_steps))
    tb = max(tb, _LANES)

    b_pad = _round_up(b_pad, tb)

    # Scoped-VMEM limit: double-buffered input + live temps + output, w/ slack.
    est = 7 * n_pad * tb * 4 + 4 * tb * 4 + 4 * n_pad * 4 + (1 << 20)
    vmem_limit = max(32 * 1024 * 1024, 2 * est)
    vmem_limit = min(vmem_limit, max(int(vmem_cap * 0.9), est))
    return tb, b_pad, int(vmem_limit)


def _macsum_kernel(xt_ref, wmax_ref, wmin_ref, out_ref):
    """xt_ref  : (N_pad, TB)  x columns permuted by phi-descending, batch on lanes.
    wmax_ref / wmin_ref : (2, N_pad) Abel-summed weights (row 0 -> y_lower,
                          row 1 -> y_upper).
    out_ref  : (2, TB)  row 0 = y_lower, row 1 = y_upper."""
    xt = xt_ref[...]                       # (N_pad, TB)
    n = xt.shape[0]
    cmax = xt
    cmin = xt

    # Hillis-Steele inclusive running max / min along the feature (sublane)
    # axis.  Small shifts (1, 2, 4): XLU roll + select from a tiny (N, 1) mask.
    shift = 1
    if n > 1:
        row = jax.lax.broadcasted_iota(jnp.int32, (n, 1), 0)
        while shift < n and shift < _SUBLANES:
            valid = row >= shift           # (N, 1); lane-broadcast inside where
            cmax = jnp.where(
                valid, jnp.maximum(cmax, pltpu.roll(cmax, shift=shift, axis=0)), cmax)
            cmin = jnp.where(
                valid, jnp.minimum(cmin, pltpu.roll(cmin, shift=shift, axis=0)), cmin)
            shift *= 2
    # Shifts >= 8 are sublane-aligned: static slices instead of roll + mask.
    while shift < n:
        cmax = jnp.concatenate(
            [cmax[:shift], jnp.maximum(cmax[shift:], cmax[:-shift])], axis=0)
        cmin = jnp.concatenate(
            [cmin[:shift], jnp.minimum(cmin[shift:], cmin[:-shift])], axis=0)
        shift *= 2

    # Weighted reduction on the (otherwise idle) MXU:
    #   out[0] = y_lower = w_pm . cmax + w_pp . cmin
    #   out[1] = y_upper = w_pp . cmax + w_pm . cmin
    out = jnp.dot(wmax_ref[...], cmax,
                  preferred_element_type=jnp.float32,
                  precision=jax.lax.Precision.HIGHEST)
    out = out + jnp.dot(wmin_ref[...], cmin,
                        preferred_element_type=jnp.float32,
                        precision=jax.lax.Precision.HIGHEST)
    out_ref[...] = out


def macsum_forward(x, phi):
    """Pallas Macsum forward.  x: (B, N) (or (N,)), phi: (N,)
    -> (y_lower, y_upper), each (B,) (or scalars for 1-D input)."""
    x = jnp.asarray(x, jnp.float32)
    phi = jnp.asarray(phi, jnp.float32)
    squeeze = x.ndim == 1
    if squeeze:
        x = x[None, :]
    B, N = x.shape
    assert phi.shape == (N,), (phi.shape, N)

    # _recompute_phi_derived_attrs (cheap glue, plain JAX).
    perm_dec = jnp.argsort(-phi)                       # phi sorted descending
    pp = jnp.maximum(phi, 0.0)[perm_dec]               # phi_plus  (sorted)
    pm = jnp.minimum(phi, 0.0)[perm_dec]               # phi_minus (sorted)

    # Abel summation: fold the first difference of the running extrema onto
    # the tiny (N,) phi vectors; pack them into the (2, N_pad) MXU weight
    # matrices (row 0 -> y_lower, row 1 -> y_upper).
    zero = jnp.zeros((1,), jnp.float32)
    w_pp = pp - jnp.concatenate([pp[1:], zero])        # (N,)
    w_pm = pm - jnp.concatenate([pm[1:], zero])        # (N,)

    n_pad = _round_up(max(N, 1), _SUBLANES)            # padded rows have 0 weight
    wmax = jnp.zeros((2, n_pad), jnp.float32)
    wmax = wmax.at[0, :N].set(w_pm).at[1, :N].set(w_pp)    # multiplies cmax
    wmin = jnp.zeros((2, n_pad), jnp.float32)
    wmin = wmin.at[0, :N].set(w_pp).at[1, :N].set(w_pm)    # multiplies cmin

    # Single fused gather+transpose so batch lands on the lane axis (one extra
    # HBM round trip of x; see TODO above for the N >= 128 in-kernel variant).
    x_t = jnp.take(x, perm_dec, axis=1).T              # (N, B)

    b_pad0 = _round_up(B, _LANES)
    tb, b_pad, vmem_limit = _pick_tiling(n_pad, b_pad0)
    # Zero padding is inert: padded feature rows carry zero weight and the scan
    # is causal; padded batch lanes are sliced off below.
    x_t = jnp.pad(x_t, ((0, n_pad - N), (0, b_pad - B)))

    n_steps = int(math.ceil(math.log2(n_pad))) if n_pad > 1 else 0
    cost = pl.CostEstimate(
        # ~5 VPU ops / element / scan step + two (2, N) x (N, TB) MXU dots
        flops=int(b_pad * n_pad * (5 * n_steps + 8)),
        transcendentals=0,
        # kernel HBM traffic + the wrapper's fused gather+transpose of x
        bytes_accessed=int(4 * (n_pad * b_pad + 2 * b_pad + 4 * n_pad) + 8 * B * N),
    )

    out = pl.pallas_call(
        _macsum_kernel,
        out_shape=jax.ShapeDtypeStruct((2, b_pad), jnp.float32),
        grid=(b_pad // tb,),
        in_specs=[
            pl.BlockSpec((n_pad, tb), lambda i: (0, i)),
            pl.BlockSpec((2, n_pad), lambda i: (0, 0)),
            pl.BlockSpec((2, n_pad), lambda i: (0, 0)),
        ],
        out_specs=pl.BlockSpec((2, tb), lambda i: (0, i)),
        compiler_params=pltpu.CompilerParams(
            dimension_semantics=("parallel",),
            vmem_limit_bytes=vmem_limit,
        ),
        cost_estimate=cost,
    )(x_t, wmax, wmin)

    y_lower, y_upper = out[0, :B], out[1, :B]
    if squeeze:
        return y_lower[0], y_upper[0]
    return y_lower, y_upper


def macsum_reference(x, phi):
    """Pure-JAX reference mirroring the PyTorch forward (float32)."""
    x = jnp.asarray(x, jnp.float32)
    phi = jnp.asarray(phi, jnp.float32)
    perm = jnp.argsort(-phi)
    pp = jnp.maximum(phi, 0.0)[perm]
    pm = jnp.minimum(phi, 0.0)[perm]
    xs = jnp.take(x, perm, axis=1)
    cmax = jax.lax.cummax(xs, axis=1)
    cmin = jax.lax.cummin(xs, axis=1)
    pad = jnp.zeros((x.shape[0], 1), x.dtype)
    dmax = jnp.diff(jnp.concatenate([pad, cmax], axis=1), axis=1)
    dmin = jnp.diff(jnp.concatenate([pad, cmin], axis=1), axis=1)
    # Elementwise + sum (exact f32, no XLA matmul) so the check isolates the
    # kernel's numerics.
    y_upper = jnp.sum(dmax * pp + dmin * pm, axis=1)
    y_lower = jnp.sum(dmin * pp + dmax * pm, axis=1)
    return y_lower, y_upper


if __name__ == "__main__":
    key = jax.random.PRNGKey(0)
    # Primary shape mirrors the module's small-batch usage (batch=8, N=16,
    # phi ~ randn(N)); the extra small cases lock in non-power-of-two N (the
    # slice-scan path), multi-step batch grids and batch-lane padding.
    cases = [(8, 16), (3, 24), (300, 40)]
    for B, N in cases:
        key, k_phi, k_x = jax.random.split(key, 3)
        phi = jax.random.normal(k_phi, (N,), dtype=jnp.float32)
        x = jax.random.normal(k_x, (B, N), dtype=jnp.float32)

        y_lower, y_upper = macsum_forward(x, phi)
        jax.block_until_ready((y_lower, y_upper))

        yl_ref, yu_ref = macsum_reference(x, phi)
        assert y_lower.shape == (B,) and y_upper.shape == (B,)
        # MXU f32 (multi-pass) vs exact-VPU reference: allow a small slack.
        assert jnp.allclose(y_lower, yl_ref, atol=1e-4, rtol=1e-4), (B, N)
        assert jnp.allclose(y_upper, yu_ref, atol=1e-4, rtol=1e-4), (B, N)
        assert bool(jnp.all(y_lower <= y_upper + 1e-5)), (B, N)

    print("KERNEL_OK")
</pallas_src>

<mosaic_0001>
module attributes {stable_mosaic.version = 11 : i64} {
  func.func @_macsum_kernel(%arg0: i32, %arg1: memref<16x128xf32, #tpu.memory_space<vmem>>, %arg2: memref<2x16xf32, #tpu.memory_space<vmem>>, %arg3: memref<2x16xf32, #tpu.memory_space<vmem>>, %arg4: memref<2x128xf32, #tpu.memory_space<vmem>>) attributes {dimension_semantics = [#tpu.dimension_semantics<parallel>], iteration_bounds = array<i64: 1>, scalar_prefetch = 0 : i64, scratch_operands = 0 : i64, tpu.core_type = #tpu.core_type<tc>, window_params = [{transform_indices = @transform_0, window_bounds = array<i64: 16, 128>}, {pipeline_mode = #tpu.pipeline_mode<synchronous>, transform_indices = @transform_1, window_bounds = array<i64: 2, 16>}, {pipeline_mode = #tpu.pipeline_mode<synchronous>, transform_indices = @transform_2, window_bounds = array<i64: 2, 16>}, {transform_indices = @transform_3, window_bounds = array<i64: 2, 128>}]} {
    %c0 = arith.constant 0 : index
    %c0_0 = arith.constant 0 : index
    %0 = vector.load %arg1[%c0, %c0_0] : memref<16x128xf32, #tpu.memory_space<vmem>>, vector<16x128xf32>
    %1 = tpu.iota {dimensions = array<i32: 0>} : vector<16x1xi32>
    %c1_i32 = arith.constant 1 : i32
    %2 = vector.broadcast %c1_i32 : i32 to vector<16x1xi32>
    %3 = arith.cmpi sge, %1, %2 : vector<16x1xi32>
    %c1_i32_1 = arith.constant 1 : i32
    %4 = tpu.dynamic_rotate %0 by %c1_i32_1 dim 0 : vector<16x128xf32>, i32 -> vector<16x128xf32>
    %5 = arith.maximumf %0, %4 : vector<16x128xf32>
    %6 = vector.shape_cast %3 : vector<16x1xi1> to vector<16x1xi1>
    %7 = vector.broadcast %6 : vector<16x1xi1> to vector<16x128xi1>
    %8 = arith.select %7, %5, %0 : vector<16x128xi1>, vector<16x128xf32>
    %c1_i32_2 = arith.constant 1 : i32
    %9 = tpu.dynamic_rotate %0 by %c1_i32_2 dim 0 : vector<16x128xf32>, i32 -> vector<16x128xf32>
    %10 = arith.minimumf %0, %9 : vector<16x128xf32>
    %11 = vector.shape_cast %3 : vector<16x1xi1> to vector<16x1xi1>
    %12 = vector.broadcast %11 : vector<16x1xi1> to vector<16x128xi1>
    %13 = arith.select %12, %10, %0 : vector<16x128xi1>, vector<16x128xf32>
    %c2_i32 = arith.constant 2 : i32
    %14 = vector.broadcast %c2_i32 : i32 to vector<16x1xi32>
    %15 = arith.cmpi sge, %1, %14 : vector<16x1xi32>
    %c2_i32_3 = arith.constant 2 : i32
    %16 = tpu.dynamic_rotate %8 by %c2_i32_3 dim 0 : vector<16x128xf32>, i32 -> vector<16x128xf32>
    %17 = arith.maximumf %8, %16 : vector<16x128xf32>
    %18 = vector.shape_cast %15 : vector<16x1xi1> to vector<16x1xi1>
    %19 = vector.broadcast %18 : vector<16x1xi1> to vector<16x128xi1>
    %20 = arith.select %19, %17, %8 : vector<16x128xi1>, vector<16x128xf32>
    %c2_i32_4 = arith.constant 2 : i32
    %21 = tpu.dynamic_rotate %13 by %c2_i32_4 dim 0 : vector<16x128xf32>, i32 -> vector<16x128xf32>
    %22 = arith.minimumf %13, %21 : vector<16x128xf32>
    %23 = vector.shape_cast %15 : vector<16x1xi1> to vector<16x1xi1>
    %24 = vector.broadcast %23 : vector<16x1xi1> to vector<16x128xi1>
    %25 = arith.select %24, %22, %13 : vector<16x128xi1>, vector<16x128xf32>
    %c4_i32 = arith.constant 4 : i32
    %26 = vector.broadcast %c4_i32 : i32 to vector<16x1xi32>
    %27 = arith.cmpi sge, %1, %26 : vector<16x1xi32>
    %c4_i32_5 = arith.constant 4 : i32
    %28 = tpu.dynamic_rotate %20 by %c4_i32_5 dim 0 : vector<16x128xf32>, i32 -> vector<16x128xf32>
    %29 = arith.maximumf %20, %28 : vector<16x128xf32>
    %30 = vector.shape_cast %27 : vector<16x1xi1> to vector<16x1xi1>
    %31 = vector.broadcast %30 : vector<16x1xi1> to vector<16x128xi1>
    %32 = arith.select %31, %29, %20 : vector<16x128xi1>, vector<16x128xf32>
    %c4_i32_6 = arith.constant 4 : i32
    %33 = tpu.dynamic_rotate %25 by %c4_i32_6 dim 0 : vector<16x128xf32>, i32 -> vector<16x128xf32>
    %34 = arith.minimumf %25, %33 : vector<16x128xf32>
    %35 = vector.shape_cast %27 : vector<16x1xi1> to vector<16x1xi1>
    %36 = vector.broadcast %35 : vector<16x1xi1> to vector<16x128xi1>
    %37 = arith.select %36, %34, %25 : vector<16x128xi1>, vector<16x128xf32>
    %38 = vector.extract_strided_slice %32 {offsets = [0, 0], sizes = [8, 128], strides = [1, 1]} : vector<16x128xf32> to vector<8x128xf32>
    %39 = vector.extract_strided_slice %32 {offsets = [8, 0], sizes = [8, 128], strides = [1, 1]} : vector<16x128xf32> to vector<8x128xf32>
    %40 = vector.extract_strided_slice %32 {offsets = [0, 0], sizes = [8, 128], strides = [1, 1]} : vector<16x128xf32> to vector<8x128xf32>
    %41 = arith.maximumf %39, %40 : vector<8x128xf32>
    %42 = tpu.concatenate %38, %41 in 0 : vector<8x128xf32>, vector<8x128xf32> -> vector<16x128xf32>
    %43 = vector.extract_strided_slice %37 {offsets = [0, 0], sizes = [8, 128], strides = [1, 1]} : vector<16x128xf32> to vector<8x128xf32>
    %44 = vector.extract_strided_slice %37 {offsets = [8, 0], sizes = [8, 128], strides = [1, 1]} : vector<16x128xf32> to vector<8x128xf32>
    %45 = vector.extract_strided_slice %37 {offsets = [0, 0], sizes = [8, 128], strides = [1, 1]} : vector<16x128xf32> to vector<8x128xf32>
    %46 = arith.minimumf %44, %45 : vector<8x128xf32>
    %47 = tpu.concatenate %43, %46 in 0 : vector<8x128xf32>, vector<8x128xf32> -> vector<16x128xf32>
    %c0_7 = arith.constant 0 : index
    %c0_8 = arith.constant 0 : index
    %48 = vector.load %arg2[%c0_7, %c0_8] : memref<2x16xf32, #tpu.memory_space<vmem>>, vector<2x16xf32>
    %cst = arith.constant dense<0.000000e+00> : vector<2x128xf32>
    %49 = tpu.matmul %48, %42, %cst {dimension_numbers = #tpu.dot_dimension_numbers<[1], [0], [0], [1], [0, 0, 1, 1], [], []>, precision = #tpu.contract_precision<fp32>} : vector<2x16xf32>, vector<16x128xf32>, vector<2x128xf32> -> vector<2x128xf32>
    %c0_9 = arith.constant 0 : index
    %c0_10 = arith.constant 0 : index
    %50 = vector.load %arg3[%c0_9, %c0_10] : memref<2x16xf32, #tpu.memory_space<vmem>>, vector<2x16xf32>
    %cst_11 = arith.constant dense<0.000000e+00> : vector<2x128xf32>
    %51 = tpu.matmul %50, %47, %cst_11 {dimension_numbers = #tpu.dot_dimension_numbers<[1], [0], [0], [1], [0, 0, 1, 1], [], []>, precision = #tpu.contract_precision<fp32>} : vector<2x16xf32>, vector<16x128xf32>, vector<2x128xf32> -> vector<2x128xf32>
    %52 = arith.addf %49, %51 : vector<2x128xf32>
    %c0_12 = arith.constant 0 : index
    %c0_13 = arith.constant 0 : index
    %53 = vector.load %arg4[%c0_12, %c0_13] : memref<2x128xf32, #tpu.memory_space<vmem>>, vector<2x128xf32>
    tpu.vector_store %arg4[%c0_12, %c0_13], %52 {strides = array<i32>} : memref<2x128xf32, #tpu.memory_space<vmem>>, vector<2x128xf32>,
    return
  }
  func.func @transform_0(%arg0: i32) -> (i32, i32) {
    %c0_i32 = arith.constant 0 : i32
    %c0_i32_0 = arith.constant 0 : i32
    return %c0_i32, %arg0 : i32, i32
  }
  func.func @transform_1(%arg0: i32) -> (i32, i32) {
    %c0_i32 = arith.constant 0 : i32
    %c0_i32_0 = arith.constant 0 : i32
    %c0_i32_1 = arith.constant 0 : i32
    return %c0_i32, %c0_i32_0 : i32, i32
  }
  func.func @transform_2(%arg0: i32) -> (i32, i32) {
    %c0_i32 = arith.constant 0 : i32
    %c0_i32_0 = arith.constant 0 : i32
    %c0_i32_1 = arith.constant 0 : i32
    return %c0_i32, %c0_i32_0 : i32, i32
  }
  func.func @transform_3(%arg0: i32) -> (i32, i32) {
    %c0_i32 = arith.constant 0 : i32
    %c0_i32_0 = arith.constant 0 : i32
    return %c0_i32, %arg0 : i32, i32
  }
}

</mosaic_0001>

<llo_original>
// kernel: tpu_custom_call.1
$region0: #{tpu_custom_call.1}
  #allocation0 [shape = 'u32[]', space=smem, size = 0x4, offset = 0x4, fixed_abs, tag = 'smem constant byte address 0x4 - core index']
  #allocation1 [shape = 'u32[72,128]{1,0:T(1,128)}', space=vmem, size = 0x9000, scoped, tag = 'internal scratch']
  %s0 = inlined_call_operand.hbm [shape: f32[16,128], index: 0, kind: input, shape index: {}]
  %s1 = inlined_call_operand.hbm [shape: f32[2,16], index: 1, kind: input, shape index: {}]
  %s2 = inlined_call_operand.hbm [shape: f32[2,16], index: 2, kind: input, shape index: {}]
  %s3 = inlined_call_operand.hbm [shape: f32[2,128], index: 3, kind: output, shape index: {}]
  %s4 = sld [smem:[#allocation0]]
  $region34: #{tpu_custom_call.1} parent=0
    _
  %s6 = ssub.s32 1, %s4
  %s7 = scalar_select 0, %s6, %s4
  $region1: #{tpu_custom_call.1} parent=0
    #allocation2 [shape = 'u8[8192]{0}', space=vmem, size = 0x2000, scoped, tag = 'input window, operand 0, single buffered']
    #allocation3 [shape = 's32[1]{0}', space=sflag, size = 0x4, scoped, tag = 'scoped memory for tpu_custom_call.1']
    #allocation4 [shape = 's32[1]{0}', space=sflag, size = 0x4, scoped, tag = 'scoped memory for tpu_custom_call.1']
    #allocation5 [shape = 'u8[1024]{0}', space=vmem, size = 0x400, scoped, tag = 'input window, operand 1, single buffered']
    #allocation6 [shape = 's32[1]{0}', space=sflag, size = 0x4, scoped, tag = 'scoped memory for tpu_custom_call.1']
    #allocation7 [shape = 'u8[1024]{0}', space=vmem, size = 0x400, scoped, tag = 'input window, operand 2, single buffered']
    #allocation8 [shape = 'u8[1024]{0}', space=vmem, size = 0x400, scoped, tag = 'output window, operand 0, single buffered']
    %8 = vsyncpa [#allocation3], 0
    %9 = vsyncpa [#allocation6], 0
    %10 = vsyncpa [#allocation4], 0
    // Predicated region
    $region2: #{tpu_custom_call.1} parent=1 // pred_check
      _
    $region3: #{tpu_custom_call.1} parent=1 // pred_check_branch
      %12 = sbr.rel (0) target = $region5
    $region4: #{tpu_custom_call.1} parent=1 // pred_region
      %14 = vsyncadd [#allocation3], 0
      %s15 = sshll.u32 %s0, 4
      %s16 = int_to_ptr.hbm [resolvable:$true] %s15
      %s17 = sshll.u32 [#allocation2], 4
      %s18 = int_to_ptr.vmem [resolvable:$true] %s17
      %23 = dma.hbm_to_vmem [thread:$0]  %s16, 256, %s18, [#allocation3], 128, 128, 8
    $region5: #{tpu_custom_call.1} parent=1 // pred_fallthru
      _
    // Predicated region
    $region6: #{tpu_custom_call.1} parent=1 // pred_check
      _
    $region7: #{tpu_custom_call.1} parent=1 // pred_check_branch
      %25 = sbr.rel (0) target = $region9
    $region8: #{tpu_custom_call.1} parent=1 // pred_region
      %27 = vsyncadd [#allocation6], 0
      %s29 = sshll.u32 %s1, 4
      %s30 = int_to_ptr.hbm [resolvable:$true] %s29
      %s31 = sshll.u32 [#allocation5], 4
      %s32 = int_to_ptr.vmem [resolvable:$true] %s31
      %34 = dma.hbm_to_vmem [thread:$0]  %s30, 32, %s32, [#allocation6]
    $region9: #{tpu_custom_call.1} parent=1 // pred_fallthru
      _
    // Predicated region
    $region10: #{tpu_custom_call.1} parent=1 // pred_check
      _
    $region11: #{tpu_custom_call.1} parent=1 // pred_check_branch
      %36 = sbr.rel (0) target = $region13
    $region12: #{tpu_custom_call.1} parent=1 // pred_region
      %38 = vsyncadd [#allocation6], 0
      %s40 = sshll.u32 %s2, 4
      %s41 = int_to_ptr.hbm [resolvable:$true] %s40
      %s42 = sshll.u32 [#allocation7], 4
      %s43 = int_to_ptr.vmem [resolvable:$true] %s42
      %45 = dma.hbm_to_vmem [thread:$0]  %s41, 32, %s43, [#allocation6]
    $region13: #{tpu_custom_call.1} parent=1 // pred_fallthru
      _
    // Predicated region
    $region14: #{tpu_custom_call.1} parent=1 // pred_check
      _
    $region15: #{tpu_custom_call.1} parent=1 // pred_check_branch
      %47 = sbr.rel (0) target = $region17
    $region16: #{tpu_custom_call.1} parent=1 // pred_region
      %49 = dma.done [#allocation3], 256
    $region17: #{tpu_custom_call.1} parent=1 // pred_fallthru
      _
    // Predicated region
    $region18: #{tpu_custom_call.1} parent=1 // pred_check
      _
    $region19: #{tpu_custom_call.1} parent=1 // pred_check_branch
      %51 = sbr.rel (0) target = $region21
    $region20: #{tpu_custom_call.1} parent=1 // pred_region
      %53 = dma.done [#allocation6], 32
    $region21: #{tpu_custom_call.1} parent=1 // pred_fallthru
      _
    // Predicated region
    $region22: #{tpu_custom_call.1} parent=1 // pred_check
      _
    $region23: #{tpu_custom_call.1} parent=1 // pred_check_branch
      %55 = sbr.rel (0) target = $region25
    $region24: #{tpu_custom_call.1} parent=1 // pred_region
      %57 = dma.done [#allocation6], 32
    $region25: #{tpu_custom_call.1} parent=1 // pred_fallthru
      _
    %v58 = vld [vmem:[#allocation2] sm:$0xff]
    %v59 = vld [vmem:[#allocation2 + $0x8] sm:$0xff]
    %v60 = vlaneseq
    %v61 = vshrl.u32 %v60, 7
    %v62 = vadd.s32 %v61, 8
    %vm63 = vcmp.ge.s32.totalorder %v61, 1
    %vm64 = vcmp.ge.s32.totalorder %v62, 1
    %v65 = vrot.slane %v58, 7
    %v66 = vrot.slane %v59, 7
    %vm67 = vcmp.lt.s32.totalorder %v61, 1
    %v68 = vsel %vm67, %v65, %v66
    %v69 = vsel %vm67, %v66, %v65
    %v70 = vmax.f32 %v58, %v69
    %v71 = vmax.f32 %v59, %v68
    %v72 = vsel %vm63, 1, 0
    %v73 = vsel %vm64, 1, 0
    %vm74 = vcmp.eq.s32.totalorder %v72, 1
    %vm75 = vcmp.eq.s32.totalorder %v73, 1
    %v76 = vsel %vm74, %v70, %v58
    %v77 = vsel %vm75, %v71, %v59
    %v78 = vmin.f32 %v58, %v69
    %v79 = vmin.f32 %v59, %v68
    %v80 = vsel %vm74, %v78, %v58
    %v81 = vsel %vm75, %v79, %v59
    %vm82 = vcmp.ge.s32.totalorder %v61, 2
    %vm83 = vcmp.ge.s32.totalorder %v62, 2
    %v84 = vrot.slane %v76, 6
    %v85 = vrot.slane %v77, 6
    %vm86 = vcmp.lt.s32.totalorder %v61, 2
    %v87 = vsel %vm86, %v84, %v85
    %v88 = vsel %vm86, %v85, %v84
    %v89 = vmax.f32 %v76, %v88
    %v90 = vmax.f32 %v77, %v87
    %v91 = vsel %vm82, 1, 0
    %v92 = vsel %vm83, 1, 0
    %vm93 = vcmp.eq.s32.totalorder %v91, 1
    %vm94 = vcmp.eq.s32.totalorder %v92, 1
    %v95 = vsel %vm93, %v89, %v76
    %v96 = vsel %vm94, %v90, %v77
    %v97 = vrot.slane %v80, 6
    %v98 = vrot.slane %v81, 6
    %v99 = vsel %vm86, %v97, %v98
    %v100 = vsel %vm86, %v98, %v97
    %v101 = vmin.f32 %v80, %v100
    %v102 = vmin.f32 %v81, %v99
    %v103 = vsel %vm93, %v101, %v80
    %v104 = vsel %vm94, %v102, %v81
    %vm105 = vcmp.ge.s32.totalorder %v61, 4
    %vm106 = vcmp.ge.s32.totalorder %v62, 4
    %v107 = vrot.slane %v95, 4
    %v108 = vrot.slane %v96, 4
    %vm109 = vcmp.lt.s32.totalorder %v61, 4
    %v110 = vsel %vm109, %v107, %v108
    %v111 = vsel %vm109, %v108, %v107
    %v112 = vmax.f32 %v95, %v111
    %v113 = vmax.f32 %v96, %v110
    %v114 = vsel %vm105, 1, 0
    %v115 = vsel %vm106, 1, 0
    %vm116 = vcmp.eq.s32.totalorder %v114, 1
    %vm117 = vcmp.eq.s32.totalorder %v115, 1
    %v118 = vsel %vm116, %v112, %v95
    %v119 = vsel %vm117, %v113, %v96
    %v120 = vrot.slane %v103, 4
    %v121 = vrot.slane %v104, 4
    %v122 = vsel %vm109, %v120, %v121
    %v123 = vsel %vm109, %v121, %v120
    %v124 = vmin.f32 %v103, %v123
    %v125 = vmin.f32 %v104, %v122
    %v126 = vsel %vm116, %v124, %v103
    %v127 = vsel %vm117, %v125, %v104
    %v128 = vmax.f32 %v119, %v118
    %v129 = vmin.f32 %v127, %v126
    %v130 = vld [vmem:[#allocation5] sm:$0x3]
    %v131 = vld [vmem:[#allocation7] sm:$0x3]
    %vm132 = vcmask 130048
    %v134 = vsel %vm132, %v131, 0
    %136 = vmatpush.msra.mxu0 0.0
    %137 = vmatpush.msra.mxu0 0.0
    %138 = vmatpush.msra.mxu0 0.0
    %139 = vmatpush.msra.mxu0 0.0
    %140 = vmatpush.msra.mxu0 0.0
    %141 = vmatpush.msra.mxu0 0.0
    %142 = vmatpush.msra.mxu0 0.0
    %143 = vmatpush.msra.mxu0 0.0
    %144 = vmatpush.msra.mxu0 0.0
    %145 = vmatpush.msra.mxu0 0.0
    %146 = vmatpush.msra.mxu0 0.0
    %147 = vmatpush.msra.mxu0 0.0
    %148 = vmatpush.msra.mxu0 0.0
    %149 = vmatpush.msra.mxu0 0.0
    %v150 = vand.u32 %v129, 4294901760
    %151 = vmatpush.msra.mxu0 %v150
    %v152 = vand.u32 %v126, 4294901760
    %153 = vmatpush.msra.mxu0 %v152
    %v154 = vand.u32 %v134, 4294901760
    %v155 = vsub.f32 %v134, %v154
    %v156 = vand.u32 %v155, 4294901760
    %v157 = vsub.f32 %v155, %v156
    %v158 = vand.u32 %v157, 4294901760
    %159 = vmatmul.f32.gmra.mxu0 %v158
    %v160 = vpop.f32.mrf.mxu0
    %v161 = vadd.f32 0.0, %v160
    %162 = vdwg.mxu0
    %163 = vmatpush.msra.mxu0 0.0
    %164 = vmatpush.msra.mxu0 0.0
    %165 = vmatpush.msra.mxu0 0.0
    %166 = vmatpush.msra.mxu0 0.0
    %167 = vmatpush.msra.mxu0 0.0
    %168 = vmatpush.msra.mxu0 0.0
    %169 = vmatpush.msra.mxu0 0.0
    %170 = vmatpush.msra.mxu0 0.0
    %171 = vmatpush.msra.mxu0 0.0
    %172 = vmatpush.msra.mxu0 0.0
    %173 = vmatpush.msra.mxu0 0.0
    %174 = vmatpush.msra.mxu0 0.0
    %175 = vmatpush.msra.mxu0 0.0
    %176 = vmatpush.msra.mxu0 0.0
    %v177 = vand.u32 %v129, 4294901760
    %v178 = vsub.f32 %v129, %v177
    %v179 = vand.u32 %v178, 4294901760
    %v180 = vsub.f32 %v178, %v179
    %v181 = vand.u32 %v180, 4294901760
    %182 = vmatpush.msra.mxu0 %v181
    %v183 = vand.u32 %v126, 4294901760
    %v184 = vsub.f32 %v126, %v183
    %v185 = vand.u32 %v184, 4294901760
    %v186 = vsub.f32 %v184, %v185
    %v187 = vand.u32 %v186, 4294901760
    %188 = vmatpush.msra.mxu0 %v187
    %v189 = vand.u32 %v134, 4294901760
    %190 = vmatmul.f32.gmra.mxu0 %v189
    %v191 = vpop.f32.mrf.mxu0
    %v192 = vadd.f32 %v161, %v191
    %193 = vdwg.mxu0
    %194 = vmatpush.msra.mxu0 0.0
    %195 = vmatpush.msra.mxu0 0.0
    %196 = vmatpush.msra.mxu0 0.0
    %197 = vmatpush.msra.mxu0 0.0
    %198 = vmatpush.msra.mxu0 0.0
    %199 = vmatpush.msra.mxu0 0.0
    %200 = vmatpush.msra.mxu0 0.0
    %201 = vmatpush.msra.mxu0 0.0
    %202 = vmatpush.msra.mxu0 0.0
    %203 = vmatpush.msra.mxu0 0.0
    %204 = vmatpush.msra.mxu0 0.0
    %205 = vmatpush.msra.mxu0 0.0
    %206 = vmatpush.msra.mxu0 0.0
    %207 = vmatpush.msra.mxu0 0.0
    %v208 = vand.u32 %v129, 4294901760
    %v209 = vsub.f32 %v129, %v208
    %210 = vmatpush.msra.mxu0 %v209
    %v211 = vand.u32 %v126, 4294901760
    %v212 = vsub.f32 %v126, %v211
    %213 = vmatpush.msra.mxu0 %v212
    %v214 = vand.u32 %v134, 4294901760
    %v215 = vsub.f32 %v134, %v214
    %216 = vmatmul.f32.gmra.mxu0 %v215
    %v217 = vpop.f32.mrf.mxu0
    %v218 = vadd.f32 %v192, %v217
    %219 = vdwg.mxu0
    %220 = vmatpush.msra.mxu0 0.0
    %221 = vmatpush.msra.mxu0 0.0
    %222 = vmatpush.msra.mxu0 0.0
    %223 = vmatpush.msra.mxu0 0.0
    %224 = vmatpush.msra.mxu0 0.0
    %225 = vmatpush.msra.mxu0 0.0
    %226 = vmatpush.msra.mxu0 0.0
    %227 = vmatpush.msra.mxu0 0.0
    %228 = vmatpush.msra.mxu0 0.0
    %229 = vmatpush.msra.mxu0 0.0
    %230 = vmatpush.msra.mxu0 0.0
    %231 = vmatpush.msra.mxu0 0.0
    %232 = vmatpush.msra.mxu0 0.0
    %233 = vmatpush.msra.mxu0 0.0
    %v234 = vand.u32 %v129, 4294901760
    %235 = vmatpush.msra.mxu0 %v234
    %v236 = vand.u32 %v126, 4294901760
    %237 = vmatpush.msra.mxu0 %v236
    %v238 = vand.u32 %v134, 4294901760
    %v239 = vsub.f32 %v134, %v238
    %v240 = vand.u32 %v239, 4294901760
    %241 = vmatmul.f32.gmra.mxu0 %v240
    %v242 = vpop.f32.mrf.mxu0
    %v243 = vadd.f32 %v218, %v242
    %244 = vdwg.mxu0
    %245 = vmatpush.msra.mxu0 0.0
    %246 = vmatpush.msra.mxu0 0.0
    %247 = vmatpush.msra.mxu0 0.0
    %248 = vmatpush.msra.mxu0 0.0
    %249 = vmatpush.msra.mxu0 0.0
    %250 = vmatpush.msra.mxu0 0.0
    %251 = vmatpush.msra.mxu0 0.0
    %252 = vmatpush.msra.mxu0 0.0
    %253 = vmatpush.msra.mxu0 0.0
    %254 = vmatpush.msra.mxu0 0.0
    %255 = vmatpush.msra.mxu0 0.0
    %256 = vmatpush.msra.mxu0 0.0
    %257 = vmatpush.msra.mxu0 0.0
    %258 = vmatpush.msra.mxu0 0.0
    %v259 = vand.u32 %v129, 4294901760
    %v260 = vsub.f32 %v129, %v259
    %v261 = vand.u32 %v260, 4294901760
    %262 = vmatpush.msra.mxu0 %v261
    %v263 = vand.u32 %v126, 4294901760
    %v264 = vsub.f32 %v126, %v263
    %v265 = vand.u32 %v264, 4294901760
    %266 = vmatpush.msra.mxu0 %v265
    %v267 = vand.u32 %v134, 4294901760
    %268 = vmatmul.f32.gmra.mxu0 %v267
    %v269 = vpop.f32.mrf.mxu0
    %v270 = vadd.f32 %v243, %v269
    %271 = vdwg.mxu0
    %272 = vmatpush.msra.mxu0 0.0
    %273 = vmatpush.msra.mxu0 0.0
    %274 = vmatpush.msra.mxu0 0.0
    %275 = vmatpush.msra.mxu0 0.0
    %276 = vmatpush.msra.mxu0 0.0
    %277 = vmatpush.msra.mxu0 0.0
    %278 = vmatpush.msra.mxu0 0.0
    %279 = vmatpush.msra.mxu0 0.0
    %280 = vmatpush.msra.mxu0 0.0
    %281 = vmatpush.msra.mxu0 0.0
    %282 = vmatpush.msra.mxu0 0.0
    %283 = vmatpush.msra.mxu0 0.0
    %284 = vmatpush.msra.mxu0 0.0
    %285 = vmatpush.msra.mxu0 0.0
    %v286 = vand.u32 %v129, 4294901760
    %287 = vmatpush.msra.mxu0 %v286
    %v288 = vand.u32 %v126, 4294901760
    %289 = vmatpush.msra.mxu0 %v288
    %v290 = vand.u32 %v134, 4294901760
    %291 = vmatmul.f32.gmra.mxu0 %v290
    %v292 = vpop.f32.mrf.mxu0
    %v293 = vadd.f32 %v270, %v292
    %294 = vdwg.mxu0
    %v296 = vsel %vm132, %v130, 0
    %298 = vmatpush.msra.mxu0 0.0
    %299 = vmatpush.msra.mxu0 0.0
    %300 = vmatpush.msra.mxu0 0.0
    %301 = vmatpush.msra.mxu0 0.0
    %302 = vmatpush.msra.mxu0 0.0
    %303 = vmatpush.msra.mxu0 0.0
    %304 = vmatpush.msra.mxu0 0.0
    %305 = vmatpush.msra.mxu0 0.0
    %306 = vmatpush.msra.mxu0 0.0
    %307 = vmatpush.msra.mxu0 0.0
    %308 = vmatpush.msra.mxu0 0.0
    %309 = vmatpush.msra.mxu0 0.0
    %310 = vmatpush.msra.mxu0 0.0
    %311 = vmatpush.msra.mxu0 0.0
    %v312 = vand.u32 %v128, 4294901760
    %313 = vmatpush.msra.mxu0 %v312
    %v314 = vand.u32 %v118, 4294901760
    %315 = vmatpush.msra.mxu0 %v314
    %v316 = vand.u32 %v296, 4294901760
    %v317 = vsub.f32 %v296, %v316
    %v318 = vand.u32 %v317, 4294901760
    %v319 = vsub.f32 %v317, %v318
    %v320 = vand.u32 %v319, 4294901760
    %321 = vmatmul.f32.gmra.mxu0 %v320
    %v322 = vpop.f32.mrf.mxu0
    %v323 = vadd.f32 %v293, %v322
    %324 = vdwg.mxu0
    %325 = vmatpush.msra.mxu0 0.0
    %326 = vmatpush.msra.mxu0 0.0
    %327 = vmatpush.msra.mxu0 0.0
    %328 = vmatpush.msra.mxu0 0.0
    %329 = vmatpush.msra.mxu0 0.0
    %330 = vmatpush.msra.mxu0 0.0
    %331 = vmatpush.msra.mxu0 0.0
    %332 = vmatpush.msra.mxu0 0.0
    %333 = vmatpush.msra.mxu0 0.0
    %334 = vmatpush.msra.mxu0 0.0
    %335 = vmatpush.msra.mxu0 0.0
    %336 = vmatpush.msra.mxu0 0.0
    %337 = vmatpush.msra.mxu0 0.0
    %338 = vmatpush.msra.mxu0 0.0
    %v339 = vand.u32 %v128, 4294901760
    %v340 = vsub.f32 %v128, %v339
    %v341 = vand.u32 %v340, 4294901760
    %v342 = vsub.f32 %v340, %v341
    %v343 = vand.u32 %v342, 4294901760
    %344 = vmatpush.msra.mxu0 %v343
    %v345 = vand.u32 %v118, 4294901760
    %v346 = vsub.f32 %v118, %v345
    %v347 = vand.u32 %v346, 4294901760
    %v348 = vsub.f32 %v346, %v347
    %v349 = vand.u32 %v348, 4294901760
    %350 = vmatpush.msra.mxu0 %v349
    %v351 = vand.u32 %v296, 4294901760
    %352 = vmatmul.f32.gmra.mxu0 %v351
    %v353 = vpop.f32.mrf.mxu0
    %v354 = vadd.f32 %v323, %v353
    %355 = vdwg.mxu0
    %356 = vmatpush.msra.mxu0 0.0
    %357 = vmatpush.msra.mxu0 0.0
    %358 = vmatpush.msra.mxu0 0.0
    %359 = vmatpush.msra.mxu0 0.0
    %360 = vmatpush.msra.mxu0 0.0
    %361 = vmatpush.msra.mxu0 0.0
    %362 = vmatpush.msra.mxu0 0.0
    %363 = vmatpush.msra.mxu0 0.0
    %364 = vmatpush.msra.mxu0 0.0
    %365 = vmatpush.msra.mxu0 0.0
    %366 = vmatpush.msra.mxu0 0.0
    %367 = vmatpush.msra.mxu0 0.0
    %368 = vmatpush.msra.mxu0 0.0
    %369 = vmatpush.msra.mxu0 0.0
    %v370 = vand.u32 %v128, 4294901760
    %v371 = vsub.f32 %v128, %v370
    %372 = vmatpush.msra.mxu0 %v371
    %v373 = vand.u32 %v118, 4294901760
    %v374 = vsub.f32 %v118, %v373
    %375 = vmatpush.msra.mxu0 %v374
    %v376 = vand.u32 %v296, 4294901760
    %v377 = vsub.f32 %v296, %v376
    %378 = vmatmul.f32.gmra.mxu0 %v377
    %v379 = vpop.f32.mrf.mxu0
    %v380 = vadd.f32 %v354, %v379
    %381 = vdwg.mxu0
    %382 = vmatpush.msra.mxu0 0.0
    %383 = vmatpush.msra.mxu0 0.0
    %384 = vmatpush.msra.mxu0 0.0
    %385 = vmatpush.msra.mxu0 0.0
    %386 = vmatpush.msra.mxu0 0.0
    %387 = vmatpush.msra.mxu0 0.0
    %388 = vmatpush.msra.mxu0 0.0
    %389 = vmatpush.msra.mxu0 0.0
    %390 = vmatpush.msra.mxu0 0.0
    %391 = vmatpush.msra.mxu0 0.0
    %392 = vmatpush.msra.mxu0 0.0
    %393 = vmatpush.msra.mxu0 0.0
    %394 = vmatpush.msra.mxu0 0.0
    %395 = vmatpush.msra.mxu0 0.0
    %v396 = vand.u32 %v128, 4294901760
    %397 = vmatpush.msra.mxu0 %v396
    %v398 = vand.u32 %v118, 4294901760
    %399 = vmatpush.msra.mxu0 %v398
    %v400 = vand.u32 %v296, 4294901760
    %v401 = vsub.f32 %v296, %v400
    %v402 = vand.u32 %v401, 4294901760
    %403 = vmatmul.f32.gmra.mxu0 %v402
    %v404 = vpop.f32.mrf.mxu0
    %v405 = vadd.f32 %v380, %v404
    %406 = vdwg.mxu0
    %407 = vmatpush.msra.mxu0 0.0
    %408 = vmatpush.msra.mxu0 0.0
    %409 = vmatpush.msra.mxu0 0.0
    %410 = vmatpush.msra.mxu0 0.0
    %411 = vmatpush.msra.mxu0 0.0
    %412 = vmatpush.msra.mxu0 0.0
    %413 = vmatpush.msra.mxu0 0.0
    %414 = vmatpush.msra.mxu0 0.0
    %415 = vmatpush.msra.mxu0 0.0
    %416 = vmatpush.msra.mxu0 0.0
    %417 = vmatpush.msra.mxu0 0.0
    %418 = vmatpush.msra.mxu0 0.0
    %419 = vmatpush.msra.mxu0 0.0
    %420 = vmatpush.msra.mxu0 0.0
    %v421 = vand.u32 %v128, 4294901760
    %v422 = vsub.f32 %v128, %v421
    %v423 = vand.u32 %v422, 4294901760
    %424 = vmatpush.msra.mxu0 %v423
    %v425 = vand.u32 %v118, 4294901760
    %v426 = vsub.f32 %v118, %v425
    %v427 = vand.u32 %v426, 4294901760
    %428 = vmatpush.msra.mxu0 %v427
    %v429 = vand.u32 %v296, 4294901760
    %430 = vmatmul.f32.gmra.mxu0 %v429
    %v431 = vpop.f32.mrf.mxu0
    %v432 = vadd.f32 %v405, %v431
    %433 = vdwg.mxu0
    %434 = vmatpush.msra.mxu0 0.0
    %435 = vmatpush.msra.mxu0 0.0
    %436 = vmatpush.msra.mxu0 0.0
    %437 = vmatpush.msra.mxu0 0.0
    %438 = vmatpush.msra.mxu0 0.0
    %439 = vmatpush.msra.mxu0 0.0
    %440 = vmatpush.msra.mxu0 0.0
    %441 = vmatpush.msra.mxu0 0.0
    %442 = vmatpush.msra.mxu0 0.0
    %443 = vmatpush.msra.mxu0 0.0
    %444 = vmatpush.msra.mxu0 0.0
    %445 = vmatpush.msra.mxu0 0.0
    %446 = vmatpush.msra.mxu0 0.0
    %447 = vmatpush.msra.mxu0 0.0
    %v448 = vand.u32 %v128, 4294901760
    %449 = vmatpush.msra.mxu0 %v448
    %v450 = vand.u32 %v118, 4294901760
    %451 = vmatpush.msra.mxu0 %v450
    %v452 = vand.u32 %v296, 4294901760
    %453 = vmatmul.f32.gmra.mxu0 %v452
    %v454 = vpop.f32.mrf.mxu0
    %v455 = vadd.f32 %v432, %v454
    %456 = vdwg.mxu0
    %457 = vst [vmem:[#allocation8] sm:$0x3] %v455
    // Predicated region
    $region26: #{tpu_custom_call.1} parent=1 // pred_check
      _
    $region27: #{tpu_custom_call.1} parent=1 // pred_check_branch
      %459 = sbr.rel (0) target = $region29
    $region28: #{tpu_custom_call.1} parent=1 // pred_region
      %461 = vsyncadd [#allocation4], 0
      %s463 = sshll.u32 [#allocation8], 4
      %s464 = int_to_ptr.vmem [resolvable:$true] %s463
      %s465 = sshll.u32 %s3, 4
      %s466 = int_to_ptr.hbm [resolvable:$true] %s465
      %468 = dma.vmem_to_hbm [thread:$0]  %s464, 32, %s466, [#allocation4]
    $region29: #{tpu_custom_call.1} parent=1 // pred_fallthru
      _
    // Predicated region
    $region30: #{tpu_custom_call.1} parent=1 // pred_check
      _
    $region31: #{tpu_custom_call.1} parent=1 // pred_check_branch
      %470 = sbr.rel (0) target = $region33
    $region32: #{tpu_custom_call.1} parent=1 // pred_region
      %472 = dma.done [#allocation4], 32
    $region33: #{tpu_custom_call.1} parent=1 // pred_fallthru
      _
    %473 = vsyncpa [#allocation3], 1
    %474 = vsyncpa [#allocation6], 1
    %475 = vsyncpa [#allocation4], 1

</llo_original>
